<compile_context>
chip_gen: v6e
topology: v6e:2x2x1
jax: 0.10.0
libtpu: 0.0.40
codegen_flags: <defaults>
</compile_context>

<pallas_src>
import functools

import jax
import jax.numpy as jnp
from jax.experimental import pallas as pl
from jax.experimental.pallas import tpu as pltpu

BN_EPS = 1e-5


def _rup(v, m):
    return (v + m - 1) // m * m


# ----------------------------------------------------------------------------
# Kernel: one (batch image, spatial tile) per grid step.
#   x_ref   : (1, Cin, tp)   f32 input pixels, channel-major
#   g_ref   : (1, Cg,  tp)   f32 gating pixels
#   wx_ref  : (R, Cin)       bf16 stacked x-weights  [theta(2 branches) | M0 | M1]
#   pw_ref  : (Ci2p, Cg)     bf16 fused phi weights (row-padded to mult of 8)
#   pb_ref  : (Ci2p, 1)      f32  fused phi bias
#   psiw_ref: (2, Ci2p)      bf16 block-diagonal psi weights
#   psib_ref: (2, 1)         f32  psi bias
#   c_ref   : (Cinp, 1)      f32  folded constant term
# Outputs:
#   out_ref : (1, Cin, tp)   f32
#   att_ref : (1, 2,  tp)    f32
# ----------------------------------------------------------------------------
def _mab_kernel(x_ref, g_ref, wx_ref, pw_ref, pb_ref, psiw_ref, psib_ref, c_ref,
                out_ref, att_ref, *, ci2p, cinp, cin):
    x = x_ref[0].astype(jnp.bfloat16)                     # (Cin, tp)
    g = g_ref[0].astype(jnp.bfloat16)                     # (Cg,  tp)

    # Single tall matmul over the x-contracting dim: theta (both branches),
    # M0@x and M1@x all at once.  Row blocks are padded to multiples of 8 so
    # the slices below are sublane-aligned free views.
    big = jnp.dot(wx_ref[...], x, preferred_element_type=jnp.float32)  # (R, tp)
    theta = big[:ci2p]                                    # (Ci2p, tp)
    y0 = big[ci2p:ci2p + cinp]                            # M0 @ x
    y1 = big[ci2p + cinp:]                                # M1 @ x

    # relu(theta(x) + phi(g) + b) for both branches (padded rows stay 0).
    f = jnp.maximum(
        theta
        + jnp.dot(pw_ref[...], g, preferred_element_type=jnp.float32)
        + pb_ref[...], 0.0)                               # (Ci2p, tp)

    # psi -> sigmoid: both attention maps in one (2, tp) lane-dense result.
    att = jax.nn.sigmoid(
        jnp.dot(psiw_ref[...], f.astype(jnp.bfloat16),
                preferred_element_type=jnp.float32)
        + psib_ref[...])                                  # (2, tp)
    att_ref[0] = att.astype(att_ref.dtype)

    # Folded W/BN/combine/BN path with the attention scalar commuted through
    # the matrices: relu(a0*(M0@x) + a1*(M1@x) + const).
    out = att[0:1] * y0 + att[1:2] * y1 + c_ref[...]      # (Cinp, tp)
    out_ref[0] = jnp.maximum(out[:cin], 0.0).astype(out_ref.dtype)


# ----------------------------------------------------------------------------
# Host-side weight folding (zero runtime cost; all tiny matrices).
# ----------------------------------------------------------------------------
def _fold_params(p, mxu_dtype=jnp.bfloat16):
    Cin = p["theta_w"].shape[1]
    Ci = p["theta_w"].shape[2]
    Ci2, Ci2p = 2 * Ci, _rup(2 * Ci, 8)
    Cinp = _rup(Cin, 8)

    def pad_rows(a, rows):
        return jnp.pad(a, ((0, rows - a.shape[0]), (0, 0)))

    tw = jnp.concatenate([p["theta_w"][0].T, p["theta_w"][1].T], axis=0)   # (2Ci, Cin)
    pw = pad_rows(jnp.concatenate([p["phi_w"][0].T, p["phi_w"][1].T], 0), Ci2p)
    pb = pad_rows(jnp.concatenate([p["phi_b"][0].T, p["phi_b"][1].T], 0), Ci2p)

    z = jnp.zeros((1, Ci), jnp.float32)
    psi_bd = jnp.concatenate(
        [jnp.concatenate([p["psi_w"][0].T, z], axis=1),
         jnp.concatenate([z, p["psi_w"][1].T], axis=1)], axis=0)           # (2, 2Ci)
    psi_bd = jnp.pad(psi_bd, ((0, 0), (0, Ci2p - Ci2)))                    # (2, Ci2p)
    psi_b = p["psi_b"].reshape(2, 1)

    cbn_s = p["cbn_scale"].T                                               # (Cin, 1)
    Ms, consts = [], []
    for k in range(2):
        A_k = p["wc_w"][k].T * p["wbn_scale"][k].T                         # (Cin, Cin)
        b_k = (p["wbn_scale"][k] * p["wc_b"][k] + p["wbn_shift"][k]).T     # (Cin, 1)
        C_k = p["comb_w"][k * Cin:(k + 1) * Cin, :].T                      # (Cin, Cin)
        Ms.append(pad_rows((C_k @ A_k) * cbn_s, Cinp))                     # (Cinp, Cin)
        consts.append(C_k @ b_k)
    const = pad_rows(
        (consts[0] + consts[1] + p["comb_b"].T) * cbn_s + p["cbn_shift"].T, Cinp)

    # One tall x-contracting weight: rows [theta(both) | M0 | M1].
    wx = jnp.concatenate([pad_rows(tw, Ci2p), Ms[0], Ms[1]], axis=0)       # (R, Cin)

    weights = (wx.astype(mxu_dtype), pw.astype(mxu_dtype),
               pb.astype(jnp.float32), psi_bd.astype(mxu_dtype),
               psi_b.astype(jnp.float32), const.astype(jnp.float32))
    return weights, (Ci2p, Cinp)


# ----------------------------------------------------------------------------
# Generation-aware tiling / VMEM planning.
# ----------------------------------------------------------------------------
def _tpu_vmem_capacity_bytes():
    try:
        cap = int(getattr(pltpu.get_tpu_info(), "vmem_capacity_bytes", 0))
        if cap > 0:
            return cap
    except Exception:
        pass
    return 64 << 20   # conservative fallback (v7x per-TensorCore)


def _plan_tiling(HW, Cin, Cg, Ci2p, Cinp, N, *, max_tp=2048):
    """Pick the spatial tile (lane) size and an explicit VMEM limit."""
    cap = _tpu_vmem_capacity_bytes()
    budget = int(cap * 0.65)        # headroom for Mosaic internal scratch / spill

    R = Ci2p + 2 * Cinp
    # Per-spatial-pixel bytes: double-buffered f32 I/O tiles + live intermediates.
    io_pp = 2 * (Cin + Cg + Cin + 2) * 4
    live_pp = (R + Ci2p + Cinp + 2 + Cin) * 4 + (Cin + Cg + Ci2p) * 2
    per_pixel = io_pp + live_pp
    # Grid-invariant weights; assume the pipeline double-buffers them.
    # TODO(synk): pipeline_mode=pl.Buffered(1) on the weight specs would
    # single-buffer them (v7x VMEM win); omitted here for compatibility.
    wbytes = 2 * ((R * Cin + Ci2p * Cg + 2 * Ci2p) * 2
                  + (Ci2p + 2 + Cinp) * 4)

    tp_cap = max(128, ((budget - wbytes) // per_pixel) // 128 * 128)
    tp_cap = min(tp_cap, max_tp)

    if HW <= 128:
        tp = HW
    else:
        # Prefer a multiple of 128 that divides HW exactly (no ragged tail).
        tp, t = 0, 128
        while t <= tp_cap:
            if HW % t == 0:
                tp = t
            t += 128
        if tp == 0:
            tp = min(tp_cap, _rup(HW, 128))

    # v7x megacore: make sure both TensorCores get at least one grid step.
    while N * (-(-HW // tp)) < 2 and tp > 128:
        tp = max(128, _rup(tp // 2, 128))

    total = wbytes + per_pixel * tp + (4 << 20)     # + internal-scratch headroom
    vmem_limit = int(min(cap, max(32 << 20, total)))
    return tp, vmem_limit


# ----------------------------------------------------------------------------
# Wrapper
# ----------------------------------------------------------------------------
def multi_attention_block_2d(x, g, params, *, max_tp=2048):
    """x: (N, Cin, H, W), g: (N, Cg, H, W) NCHW. Returns (out NCHW, attention NCHW)."""
    N, Cin, H, W = x.shape
    Ng, Cg, Hg, Wg = g.shape
    assert Ng == N and (Hg, Wg) == (H, W), \
        "kernel supports sub_sample_factor=(1,1) with matching gating size"
    HW = H * W

    weights, (Ci2p, Cinp) = _fold_params(params)
    tp, vmem_limit = _plan_tiling(HW, Cin, Cg, Ci2p, Cinp, N, max_tp=max_tp)

    # NCHW -> (N, C, H*W): pure reshape, no transpose / padding / extra HBM pass.
    x3 = x.reshape(N, Cin, HW)
    g3 = g.reshape(N, Cg, HW)

    grid = (N, -(-HW // tp))

    def tile_spec(C):
        return pl.BlockSpec((1, C, tp), lambda n, s: (n, 0, s))

    def full_spec(arr):
        nd = arr.ndim
        return pl.BlockSpec(arr.shape, lambda n, s, _nd=nd: (0,) * _nd)

    kernel = functools.partial(_mab_kernel, ci2p=Ci2p, cinp=Cinp, cin=Cin)

    out3, att3 = pl.pallas_call(
        kernel,
        grid=grid,
        in_specs=[tile_spec(Cin), tile_spec(Cg)] + [full_spec(w) for w in weights],
        out_specs=[tile_spec(Cin), tile_spec(2)],
        out_shape=[jax.ShapeDtypeStruct((N, Cin, HW), jnp.float32),
                   jax.ShapeDtypeStruct((N, 2, HW), jnp.float32)],
        compiler_params=pltpu.CompilerParams(
            dimension_semantics=("parallel", "parallel"),
            vmem_limit_bytes=vmem_limit),
    )(x3, g3, *weights)

    return out3.reshape(N, Cin, H, W), att3.reshape(N, 2, H, W)


# ----------------------------------------------------------------------------
# Synthetic parameters (same layout as the PyTorch module, eval-mode BN folded)
# ----------------------------------------------------------------------------
def init_params(key, in_size, gate_size, inter_size):
    """Deterministic synthetic parameters. Per-branch params stacked along a leading axis of 2."""
    ks = jax.random.split(key, 12)

    def he(k, shape, fan_in):  # kaiming-normal-ish
        return jax.random.normal(k, shape, jnp.float32) * jnp.sqrt(2.0 / fan_in)

    p = {}
    p["theta_w"] = he(ks[0], (2, in_size, inter_size), in_size)          # theta: Cin -> Ci, no bias
    p["phi_w"] = he(ks[1], (2, gate_size, inter_size), gate_size)        # phi:   Cg  -> Ci
    p["phi_b"] = 0.01 * jax.random.normal(ks[2], (2, 1, inter_size), jnp.float32)
    p["psi_w"] = he(ks[3], (2, inter_size, 1), inter_size)               # psi:   Ci  -> 1
    p["psi_b"] = 0.01 * jax.random.normal(ks[4], (2, 1, 1), jnp.float32)
    p["wc_w"] = he(ks[5], (2, in_size, in_size), in_size)                # W:     Cin -> Cin
    p["wc_b"] = 0.01 * jax.random.normal(ks[6], (2, 1, in_size), jnp.float32)
    # BatchNorm (eval): fold gamma/beta/running stats into scale & shift
    gamma = 1.0 + 0.02 * jax.random.normal(ks[7], (2, 1, in_size), jnp.float32)
    beta = jnp.zeros((2, 1, in_size), jnp.float32)
    rmean = jnp.zeros((2, 1, in_size), jnp.float32)
    rvar = jnp.ones((2, 1, in_size), jnp.float32)
    p["wbn_scale"] = gamma / jnp.sqrt(rvar + BN_EPS)
    p["wbn_shift"] = beta - rmean * p["wbn_scale"]
    # combine_gates: 2*Cin -> Cin conv + BN
    p["comb_w"] = he(ks[8], (2 * in_size, in_size), 2 * in_size)
    p["comb_b"] = 0.01 * jax.random.normal(ks[9], (1, in_size), jnp.float32)
    cgamma = 1.0 + 0.02 * jax.random.normal(ks[10], (1, in_size), jnp.float32)
    cbeta = jnp.zeros((1, in_size), jnp.float32)
    cmean = jnp.zeros((1, in_size), jnp.float32)
    cvar = jnp.ones((1, in_size), jnp.float32)
    p["cbn_scale"] = cgamma / jnp.sqrt(cvar + BN_EPS)
    p["cbn_shift"] = cbeta - cmean * p["cbn_scale"]
    return p


# ----------------------------------------------------------------------------
# Plain-JAX f32 reference matching the ORIGINAL (unfused) module order
# ----------------------------------------------------------------------------
def reference(x, g, p):
    N, Cin, H, W = x.shape
    Cg = g.shape[1]
    P = N * H * W
    x2 = jnp.transpose(x, (0, 2, 3, 1)).reshape(P, Cin)
    g2 = jnp.transpose(g, (0, 2, 3, 1)).reshape(P, Cg)
    gates, atts = [], []
    for k in range(2):
        theta_x = x2 @ p["theta_w"][k]
        phi_g = g2 @ p["phi_w"][k] + p["phi_b"][k]
        f = jax.nn.relu(theta_x + phi_g)
        sigm = jax.nn.sigmoid(f @ p["psi_w"][k] + p["psi_b"][k])
        y = sigm * x2
        wy = (y @ p["wc_w"][k] + p["wc_b"][k]) * p["wbn_scale"][k] + p["wbn_shift"][k]
        gates.append(wy)
        atts.append(sigm)
    cat = jnp.concatenate(gates, -1)
    out = jax.nn.relu((cat @ p["comb_w"] + p["comb_b"]) * p["cbn_scale"] + p["cbn_shift"])
    out = out.reshape(N, H, W, Cin).transpose(0, 3, 1, 2)
    att = jnp.concatenate(atts, -1).reshape(N, H, W, 2).transpose(0, 3, 1, 2)
    return out, att


if __name__ == "__main__":
    N, Cin, Cg, Ci, H, W = 2, 4, 8, 4, 16, 16   # in_size=4, gate_size=8, inter_size=4
    key = jax.random.PRNGKey(0)
    kx, kg, kp = jax.random.split(key, 3)
    x = jax.random.normal(kx, (N, Cin, H, W), jnp.float32)
    g = jax.random.normal(kg, (N, Cg, H, W), jnp.float32)
    params = init_params(kp, Cin, Cg, Ci)

    out, att = multi_attention_block_2d(x, g, params)
    jax.block_until_ready((out, att))

    out_ref, att_ref = reference(x, g, params)
    assert out.shape == (N, Cin, H, W) and att.shape == (N, 2, H, W)
    # Tolerances loosened vs. the f32 version: matmul operands are bf16 on the MXU.
    assert jnp.allclose(att, att_ref, rtol=5e-2, atol=5e-2)
    assert jnp.allclose(out, out_ref, rtol=5e-2, atol=1e-1)
    print("KERNEL_OK")
</pallas_src>

<mosaic_0001>
module attributes {stable_mosaic.version = 11 : i64} {
  func.func @_mab_kernel(%arg0: i32, %arg1: i32, %arg2: memref<1x4x256xf32, #tpu.memory_space<vmem>>, %arg3: memref<1x8x256xf32, #tpu.memory_space<vmem>>, %arg4: memref<24x4xbf16, #tpu.memory_space<vmem>>, %arg5: memref<8x8xbf16, #tpu.memory_space<vmem>>, %arg6: memref<8x1xf32, #tpu.memory_space<vmem>>, %arg7: memref<2x8xbf16, #tpu.memory_space<vmem>>, %arg8: memref<2x1xf32, #tpu.memory_space<vmem>>, %arg9: memref<8x1xf32, #tpu.memory_space<vmem>>, %arg10: memref<1x4x256xf32, #tpu.memory_space<vmem>>, %arg11: memref<1x2x256xf32, #tpu.memory_space<vmem>>) attributes {dimension_semantics = [#tpu.dimension_semantics<parallel>, #tpu.dimension_semantics<parallel>], iteration_bounds = array<i64: 2, 1>, scalar_prefetch = 0 : i64, scratch_operands = 0 : i64, tpu.core_type = #tpu.core_type<tc>, window_params = [{transform_indices = @transform_0, window_bounds = array<i64: 1, 4, 256>}, {transform_indices = @transform_1, window_bounds = array<i64: 1, 8, 256>}, {pipeline_mode = #tpu.pipeline_mode<synchronous>, transform_indices = @transform_2, window_bounds = array<i64: 24, 4>}, {pipeline_mode = #tpu.pipeline_mode<synchronous>, transform_indices = @transform_3, window_bounds = array<i64: 8, 8>}, {pipeline_mode = #tpu.pipeline_mode<synchronous>, transform_indices = @transform_4, window_bounds = array<i64: 8, 1>}, {pipeline_mode = #tpu.pipeline_mode<synchronous>, transform_indices = @transform_5, window_bounds = array<i64: 2, 8>}, {pipeline_mode = #tpu.pipeline_mode<synchronous>, transform_indices = @transform_6, window_bounds = array<i64: 2, 1>}, {pipeline_mode = #tpu.pipeline_mode<synchronous>, transform_indices = @transform_7, window_bounds = array<i64: 8, 1>}, {transform_indices = @transform_8, window_bounds = array<i64: 1, 4, 256>}, {transform_indices = @transform_9, window_bounds = array<i64: 1, 2, 256>}]} {
    %c0 = arith.constant 0 : index
    %c0_0 = arith.constant 0 : index
    %c0_1 = arith.constant 0 : index
    %0 = vector.load %arg2[%c0, %c0_0, %c0_1] : memref<1x4x256xf32, #tpu.memory_space<vmem>>, vector<1x4x256xf32>
    %1 = vector.shape_cast %0 : vector<1x4x256xf32> to vector<4x256xf32>
    %2 = arith.truncf %1 : vector<4x256xf32> to vector<4x256xbf16>
    %c0_2 = arith.constant 0 : index
    %c0_3 = arith.constant 0 : index
    %c0_4 = arith.constant 0 : index
    %3 = vector.load %arg3[%c0_2, %c0_3, %c0_4] : memref<1x8x256xf32, #tpu.memory_space<vmem>>, vector<1x8x256xf32>
    %4 = vector.shape_cast %3 : vector<1x8x256xf32> to vector<8x256xf32>
    %5 = arith.truncf %4 : vector<8x256xf32> to vector<8x256xbf16>
    %c0_5 = arith.constant 0 : index
    %c0_6 = arith.constant 0 : index
    %6 = vector.load %arg4[%c0_5, %c0_6] : memref<24x4xbf16, #tpu.memory_space<vmem>>, vector<24x4xbf16>
    %cst = arith.constant dense<0.000000e+00> : vector<24x256xf32>
    %7 = tpu.matmul %6, %2, %cst {dimension_numbers = #tpu.dot_dimension_numbers<[1], [0], [0], [1], [0, 0, 1, 1], [], []>} : vector<24x4xbf16>, vector<4x256xbf16>, vector<24x256xf32> -> vector<24x256xf32>
    %8 = vector.extract_strided_slice %7 {offsets = [0, 0], sizes = [8, 256], strides = [1, 1]} : vector<24x256xf32> to vector<8x256xf32>
    %9 = vector.extract_strided_slice %7 {offsets = [8, 0], sizes = [8, 256], strides = [1, 1]} : vector<24x256xf32> to vector<8x256xf32>
    %10 = vector.extract_strided_slice %7 {offsets = [16, 0], sizes = [8, 256], strides = [1, 1]} : vector<24x256xf32> to vector<8x256xf32>
    %c0_7 = arith.constant 0 : index
    %c0_8 = arith.constant 0 : index
    %11 = vector.load %arg5[%c0_7, %c0_8] : memref<8x8xbf16, #tpu.memory_space<vmem>>, vector<8x8xbf16>
    %cst_9 = arith.constant dense<0.000000e+00> : vector<8x256xf32>
    %12 = tpu.matmul %11, %5, %cst_9 {dimension_numbers = #tpu.dot_dimension_numbers<[1], [0], [0], [1], [0, 0, 1, 1], [], []>} : vector<8x8xbf16>, vector<8x256xbf16>, vector<8x256xf32> -> vector<8x256xf32>
    %13 = arith.addf %8, %12 : vector<8x256xf32>
    %c0_10 = arith.constant 0 : index
    %c0_11 = arith.constant 0 : index
    %14 = vector.load %arg6[%c0_10, %c0_11] : memref<8x1xf32, #tpu.memory_space<vmem>>, vector<8x1xf32>
    %15 = vector.broadcast %14 : vector<8x1xf32> to vector<8x256xf32>
    %16 = arith.addf %13, %15 : vector<8x256xf32>
    %cst_12 = arith.constant 0.000000e+00 : f32
    %17 = vector.broadcast %cst_12 : f32 to vector<8x256xf32>
    %18 = arith.maximumf %16, %17 : vector<8x256xf32>
    %c0_13 = arith.constant 0 : index
    %c0_14 = arith.constant 0 : index
    %19 = vector.load %arg7[%c0_13, %c0_14] : memref<2x8xbf16, #tpu.memory_space<vmem>>, vector<2x8xbf16>
    %20 = arith.truncf %18 : vector<8x256xf32> to vector<8x256xbf16>
    %cst_15 = arith.constant dense<0.000000e+00> : vector<2x256xf32>
    %21 = tpu.matmul %19, %20, %cst_15 {dimension_numbers = #tpu.dot_dimension_numbers<[1], [0], [0], [1], [0, 0, 1, 1], [], []>} : vector<2x8xbf16>, vector<8x256xbf16>, vector<2x256xf32> -> vector<2x256xf32>
    %c0_16 = arith.constant 0 : index
    %c0_17 = arith.constant 0 : index
    %22 = vector.load %arg8[%c0_16, %c0_17] : memref<2x1xf32, #tpu.memory_space<vmem>>, vector<2x1xf32>
    %23 = vector.broadcast %22 : vector<2x1xf32> to vector<2x256xf32>
    %24 = arith.addf %21, %23 : vector<2x256xf32>
    %25 = arith.negf %24 : vector<2x256xf32>
    %26 = math.exp %25 : vector<2x256xf32>
    %cst_18 = arith.constant 1.000000e+00 : f32
    %27 = vector.broadcast %cst_18 : f32 to vector<2x256xf32>
    %28 = arith.addf %27, %26 : vector<2x256xf32>
    %29 = arith.divf %27, %28 : vector<2x256xf32>
    %c0_19 = arith.constant 0 : index
    %c0_20 = arith.constant 0 : index
    %c0_21 = arith.constant 0 : index
    %30 = vector.load %arg11[%c0_19, %c0_20, %c0_21] : memref<1x2x256xf32, #tpu.memory_space<vmem>>, vector<1x2x256xf32>
    %31 = vector.shape_cast %30 : vector<1x2x256xf32> to vector<2x256xf32>
    %32 = vector.shape_cast %29 : vector<2x256xf32> to vector<1x2x256xf32>
    tpu.vector_store %arg11[%c0_19, %c0_20, %c0_21], %32 {strides = array<i32>} : memref<1x2x256xf32, #tpu.memory_space<vmem>>, vector<1x2x256xf32>,
    %33 = vector.extract_strided_slice %29 {offsets = [0, 0], sizes = [1, 256], strides = [1, 1]} : vector<2x256xf32> to vector<1x256xf32>
    %34 = vector.broadcast %33 : vector<1x256xf32> to vector<8x256xf32>
    %35 = arith.mulf %34, %9 : vector<8x256xf32>
    %36 = vector.extract_strided_slice %29 {offsets = [1, 0], sizes = [1, 256], strides = [1, 1]} : vector<2x256xf32> to vector<1x256xf32>
    %37 = vector.broadcast %36 : vector<1x256xf32> to vector<8x256xf32>
    %38 = arith.mulf %37, %10 : vector<8x256xf32>
    %39 = arith.addf %35, %38 : vector<8x256xf32>
    %c0_22 = arith.constant 0 : index
    %c0_23 = arith.constant 0 : index
    %40 = vector.load %arg9[%c0_22, %c0_23] : memref<8x1xf32, #tpu.memory_space<vmem>>, vector<8x1xf32>
    %41 = vector.broadcast %40 : vector<8x1xf32> to vector<8x256xf32>
    %42 = arith.addf %39, %41 : vector<8x256xf32>
    %43 = vector.extract_strided_slice %42 {offsets = [0, 0], sizes = [4, 256], strides = [1, 1]} : vector<8x256xf32> to vector<4x256xf32>
    %cst_24 = arith.constant 0.000000e+00 : f32
    %44 = vector.broadcast %cst_24 : f32 to vector<4x256xf32>
    %45 = arith.maximumf %43, %44 : vector<4x256xf32>
    %c0_25 = arith.constant 0 : index
    %c0_26 = arith.constant 0 : index
    %c0_27 = arith.constant 0 : index
    %46 = vector.load %arg10[%c0_25, %c0_26, %c0_27] : memref<1x4x256xf32, #tpu.memory_space<vmem>>, vector<1x4x256xf32>
    %47 = vector.shape_cast %46 : vector<1x4x256xf32> to vector<4x256xf32>
    %48 = vector.shape_cast %45 : vector<4x256xf32> to vector<1x4x256xf32>
    tpu.vector_store %arg10[%c0_25, %c0_26, %c0_27], %48 {strides = array<i32>} : memref<1x4x256xf32, #tpu.memory_space<vmem>>, vector<1x4x256xf32>,
    return
  }
  func.func @transform_0(%arg0: i32, %arg1: i32) -> (i32, i32, i32) {
    %c0_i32 = arith.constant 0 : i32
    %c0_i32_0 = arith.constant 0 : i32
    return %arg0, %c0_i32, %arg1 : i32, i32, i32
  }
  func.func @transform_1(%arg0: i32, %arg1: i32) -> (i32, i32, i32) {
    %c0_i32 = arith.constant 0 : i32
    %c0_i32_0 = arith.constant 0 : i32
    return %arg0, %c0_i32, %arg1 : i32, i32, i32
  }
  func.func @transform_2(%arg0: i32, %arg1: i32) -> (i32, i32) {
    %c0_i32 = arith.constant 0 : i32
    %c0_i32_0 = arith.constant 0 : i32
    %c0_i32_1 = arith.constant 0 : i32
    return %c0_i32, %c0_i32_0 : i32, i32
  }
  func.func @transform_3(%arg0: i32, %arg1: i32) -> (i32, i32) {
    %c0_i32 = arith.constant 0 : i32
    %c0_i32_0 = arith.constant 0 : i32
    %c0_i32_1 = arith.constant 0 : i32
    return %c0_i32, %c0_i32_0 : i32, i32
  }
  func.func @transform_4(%arg0: i32, %arg1: i32) -> (i32, i32) {
    %c0_i32 = arith.constant 0 : i32
    %c0_i32_0 = arith.constant 0 : i32
    %c0_i32_1 = arith.constant 0 : i32
    return %c0_i32, %c0_i32_0 : i32, i32
  }
  func.func @transform_5(%arg0: i32, %arg1: i32) -> (i32, i32) {
    %c0_i32 = arith.constant 0 : i32
    %c0_i32_0 = arith.constant 0 : i32
    %c0_i32_1 = arith.constant 0 : i32
    return %c0_i32, %c0_i32_0 : i32, i32
  }
  func.func @transform_6(%arg0: i32, %arg1: i32) -> (i32, i32) {
    %c0_i32 = arith.constant 0 : i32
    %c0_i32_0 = arith.constant 0 : i32
    %c0_i32_1 = arith.constant 0 : i32
    return %c0_i32, %c0_i32_0 : i32, i32
  }
  func.func @transform_7(%arg0: i32, %arg1: i32) -> (i32, i32) {
    %c0_i32 = arith.constant 0 : i32
    %c0_i32_0 = arith.constant 0 : i32
    %c0_i32_1 = arith.constant 0 : i32
    return %c0_i32, %c0_i32_0 : i32, i32
  }
  func.func @transform_8(%arg0: i32, %arg1: i32) -> (i32, i32, i32) {
    %c0_i32 = arith.constant 0 : i32
    %c0_i32_0 = arith.constant 0 : i32
    return %arg0, %c0_i32, %arg1 : i32, i32, i32
  }
  func.func @transform_9(%arg0: i32, %arg1: i32) -> (i32, i32, i32) {
    %c0_i32 = arith.constant 0 : i32
    %c0_i32_0 = arith.constant 0 : i32
    return %arg0, %c0_i32, %arg1 : i32, i32, i32
  }
}

</mosaic_0001>

<llo_original>
// kernel: tpu_custom_call.1
$region0: #{tpu_custom_call.1}
  #allocation0 [shape = 'u32[]', space=smem, size = 0x4, offset = 0x4, fixed_abs, tag = 'smem constant byte address 0x4 - core index']
  #allocation1 [shape = 'u32[144,128]{1,0:T(1,128)}', space=vmem, size = 0x12000, scoped, tag = 'internal scratch']
  %s0 = inlined_call_operand.hbm [shape: f32[2,4,256], index: 0, kind: input, shape index: {}]
  %s1 = inlined_call_operand.vmem [shape: f32[2,8,256], index: 1, kind: input, shape index: {}]
  %s2 = inlined_call_operand.vmem [shape: bf16[24,4], index: 2, kind: input, shape index: {}]
  %s3 = inlined_call_operand.vmem [shape: bf16[8,8], index: 3, kind: input, shape index: {}]
  %s4 = inlined_call_operand.vmem [shape: f32[8,1], index: 4, kind: input, shape index: {}]
  %s5 = inlined_call_operand.vmem [shape: bf16[2,8], index: 5, kind: input, shape index: {}]
  %s6 = inlined_call_operand.vmem [shape: f32[2,1], index: 6, kind: input, shape index: {}]
  %s7 = inlined_call_operand.vmem [shape: f32[8,1], index: 7, kind: input, shape index: {}]
  %s8 = inlined_call_operand.hbm [shape: f32[2,4,256], index: 8, kind: output, shape index: {0}]
  %s9 = inlined_call_operand.hbm [shape: f32[2,2,256], index: 9, kind: output, shape index: {1}]
  %10 = xla_tuple %s8, %s9
  %s11 = sld [smem:[#allocation0]]
  $region77: #{tpu_custom_call.1} parent=0
    _
  %s13 = ssub.s32 1, %s11
  %s14 = scalar_select 0, %s13, %s11
  $region1: #{tpu_custom_call.1} parent=0
    #allocation2 [shape = 'u8[8192]{0}', space=vmem, size = 0x2000, scoped, tag = 'input window, operand 0']
    #allocation3 [shape = 's32[2]{0}', space=sflag, size = 0x8, scoped, tag = 'scoped memory for tpu_custom_call.1']
    #allocation4 [shape = 's32[2]{0}', space=sflag, size = 0x8, scoped, tag = 'scoped memory for tpu_custom_call.1']
    #allocation5 [shape = 'u8[8192]{0}', space=vmem, size = 0x2000, scoped, tag = 'output window, operand 0']
    #allocation6 [shape = 'u8[4096]{0}', space=vmem, size = 0x1000, scoped, tag = 'output window, operand 1']
    #allocation7 [shape = 's32[2]{0}', space=sflag, size = 0x8, scoped, tag = 'scoped memory for tpu_custom_call.1']
    %15 = vsyncpa [#allocation3], 0
    %s16 = scalar_lea.sflag [#allocation3], 1
    %17 = vsyncpa %s16, 0
    %18 = vsyncpa [#allocation4], 0
    %s19 = scalar_lea.sflag [#allocation4], 1
    %20 = vsyncpa %s19, 0
    %21 = vsyncpa [#allocation7], 0
    %s22 = scalar_lea.sflag [#allocation7], 1
    %23 = vsyncpa %s22, 0
    loop: start=0, step=1, limit=4
    $region2: #{tpu_custom_call.1} parent=1 // loop_pre_header
      _
    $region3: #{tpu_custom_call.1} parent=1 // loop_header
      %s25 = sphi 0, %s29
      %p26 = scmp.ge.s32.totalorder %s25, 4
      %s32 = sphi 0, %s44
      %s33 = sphi 0, %s40
      %s34 = sphi 0, %s32
      %s35 = sphi 0, %s33
      %s36 = sphi 0, %s34
      %s37 = sphi 0, %s35
      %s49 = sphi 0, %s51
      %s52 = sphi 0, %s49
      %s53 = sphi 0, %s52
      %s69 = sphi 0, %s53
      %s77 = sphi 0, %s79
      %s80 = sphi 0, %s77
      %s81 = sphi 0, %s80
      %s97 = sphi 0, %s81
      %s101 = sphi 0, %s101
      %s103 = sphi 0, %s101
      %s104 = sphi 0, %s103
      %s118 = sphi 0, %s104
      %s122 = sphi 0, %s122
      %s124 = sphi 0, %s122
      %s125 = sphi 0, %s124
      %s139 = sphi 0, %s125
      %s143 = sphi 0, %s143
      %s145 = sphi 0, %s143
      %s146 = sphi 0, %s145
      %s160 = sphi 0, %s146
      %s164 = sphi 0, %s164
      %s166 = sphi 0, %s164
      %s167 = sphi 0, %s166
      %s181 = sphi 0, %s167
      %s185 = sphi 0, %s185
      %s187 = sphi 0, %s185
      %s188 = sphi 0, %s187
      %s202 = sphi 0, %s188
      %s206 = sphi 0, %s206
      %s208 = sphi 0, %s206
      %s209 = sphi 0, %s208
      %s223 = sphi 0, %s209
      %s231 = sphi 0, %s233
      %s234 = sphi 0, %s231
      %s235 = sphi 0, %s234
      %s251 = sphi 0, %s235
      %s259 = sphi 0, %s261
      %s262 = sphi 0, %s259
      %s263 = sphi 0, %s262
      %s279 = sphi 0, %s263
    $region4: #{tpu_custom_call.1} parent=1 // loop_header_branch
      %28 = sbr.rel (%p26) target = $region8
    $region5: #{tpu_custom_call.1} parent=1 // loop_body
      %s30 = ssub.s32 %s25, 1
      %s31 = ssub.s32 %s25, 2
      %s38 = sadd.s32 1, %s33
      %p39 = scmp.ge.s32.totalorder %s38, 1
      %s40 = scalar_select %p39, 0, %s38
      %s41 = sadd.s32 1, %s32
      %s42 = scalar_select %p39, %s41, %s32
      %p43 = scmp.ge.s32.totalorder %s42, 2
      %s44 = scalar_select %p43, 0, %s42
      %s45 = ssub.s32 %s32, %s44
      %s46 = ssub.s32 %s33, %s40
      %s47 = sor.u32 %s45, %s46
      %p48 = scmp.eq.s32.totalorder %s47, 0
      %s50 = sadd.s32 %s49, 1
      %s51 = scalar_select %p48, %s49, %s50
      %p54 = pneg %p48
      %p55 = scmp.eq.s32.totalorder %s25, 1
      %p56 = por %p54, %p55
      %p57 = scmp.ne.s32.totalorder %s49, %s52
      %p58 = scmp.eq.s32.totalorder %s25, 0
      %p59 = por %p57, %p58
      %p60 = scmp.ne.s32.totalorder %s49, %s52
      %p61 = scmp.eq.s32.totalorder %s30, 1
      %p62 = por %p60, %p61
      %p63 = scmp.ne.s32.totalorder %s52, %s53
      %p64 = scmp.eq.s32.totalorder %s30, 0
      %p65 = por %p63, %p64
      %p66 = scmp.ne.s32.totalorder %s52, %s53
      %p67 = scmp.eq.s32.totalorder %s31, 1
      %p68 = por %p66, %p67
      %p70 = scmp.ne.s32.totalorder %s53, %s69
      %p71 = scmp.eq.s32.totalorder %s31, 0
      %p72 = por %p70, %p71
      %s73 = ssub.s32 %s32, %s44
      %s74 = ssub.s32 %s33, %s40
      %s75 = sor.u32 %s73, %s74
      %p76 = scmp.eq.s32.totalorder %s75, 0
      %s78 = sadd.s32 %s77, 1
      %s79 = scalar_select %p76, %s77, %s78
      %p82 = pneg %p76
      %p83 = scmp.eq.s32.totalorder %s25, 1
      %p84 = por %p82, %p83
      %p85 = scmp.ne.s32.totalorder %s77, %s80
      %p86 = scmp.eq.s32.totalorder %s25, 0
      %p87 = por %p85, %p86
      %p88 = scmp.ne.s32.totalorder %s77, %s80
      %p89 = scmp.eq.s32.totalorder %s30, 1
      %p90 = por %p88, %p89
      %p91 = scmp.ne.s32.totalorder %s80, %s81
      %p92 = scmp.eq.s32.totalorder %s30, 0
      %p93 = por %p91, %p92
      %p94 = scmp.ne.s32.totalorder %s80, %s81
      %p95 = scmp.eq.s32.totalorder %s31, 1
      %p96 = por %p94, %p95
      %p98 = scmp.ne.s32.totalorder %s81, %s97
      %p99 = scmp.eq.s32.totalorder %s31, 0
      %p100 = por %p98, %p99
      %s102 = sadd.s32 %s101, 1
      %p105 = scmp.eq.s32.totalorder %s25, 1
      %p106 = scmp.ne.s32.totalorder %s101, %s103
      %p107 = scmp.eq.s32.totalorder %s25, 0
      %p108 = por %p106, %p107
      %p109 = scmp.ne.s32.totalorder %s101, %s103
      %p110 = scmp.eq.s32.totalorder %s30, 1
      %p111 = por %p109, %p110
      %p112 = scmp.ne.s32.totalorder %s103, %s104
      %p113 = scmp.eq.s32.totalorder %s30, 0
      %p114 = por %p112, %p113
      %p115 = scmp.ne.s32.totalorder %s103, %s104
      %p116 = scmp.eq.s32.totalorder %s31, 1
      %p117 = por %p115, %p116
      %p119 = scmp.ne.s32.totalorder %s104, %s118
      %p120 = scmp.eq.s32.totalorder %s31, 0
      %p121 = por %p119, %p120
      %s123 = sadd.s32 %s122, 1
      %p126 = scmp.eq.s32.totalorder %s25, 1
      %p127 = scmp.ne.s32.totalorder %s122, %s124
      %p128 = scmp.eq.s32.totalorder %s25, 0
      %p129 = por %p127, %p128
      %p130 = scmp.ne.s32.totalorder %s122, %s124
      %p131 = scmp.eq.s32.totalorder %s30, 1
      %p132 = por %p130, %p131
      %p133 = scmp.ne.s32.totalorder %s124, %s125
      %p134 = scmp.eq.s32.totalorder %s30, 0
      %p135 = por %p133, %p134
      %p136 = scmp.ne.s32.totalorder %s124, %s125
      %p137 = scmp.eq.s32.totalorder %s31, 1
      %p138 = por %p136, %p137
      %p140 = scmp.ne.s32.totalorder %s125, %s139
      %p141 = scmp.eq.s32.totalorder %s31, 0
      %p142 = por %p140, %p141
      %s144 = sadd.s32 %s143, 1
      %p147 = scmp.eq.s32.totalorder %s25, 1
      %p148 = scmp.ne.s32.totalorder %s143, %s145
      %p149 = scmp.eq.s32.totalorder %s25, 0
      %p150 = por %p148, %p149
      %p151 = scmp.ne.s32.totalorder %s143, %s145
      %p152 = scmp.eq.s32.totalorder %s30, 1
      %p153 = por %p151, %p152
      %p154 = scmp.ne.s32.totalorder %s145, %s146
      %p155 = scmp.eq.s32.totalorder %s30, 0
      %p156 = por %p154, %p155
      %p157 = scmp.ne.s32.totalorder %s145, %s146
      %p158 = scmp.eq.s32.totalorder %s31, 1
      %p159 = por %p157, %p158
      %p161 = scmp.ne.s32.totalorder %s146, %s160
      %p162 = scmp.eq.s32.totalorder %s31, 0
      %p163 = por %p161, %p162
      %s165 = sadd.s32 %s164, 1
      %p168 = scmp.eq.s32.totalorder %s25, 1
      %p169 = scmp.ne.s32.totalorder %s164, %s166
      %p170 = scmp.eq.s32.totalorder %s25, 0
      %p171 = por %p169, %p170
      %p172 = scmp.ne.s32.totalorder %s164, %s166
      %p173 = scmp.eq.s32.totalorder %s30, 1
      %p174 = por %p172, %p173
      %p175 = scmp.ne.s32.totalorder %s166, %s167
      %p176 = scmp.eq.s32.totalorder %s30, 0
      %p177 = por %p175, %p176
      %p178 = scmp.ne.s32.totalorder %s166, %s167
      %p179 = scmp.eq.s32.totalorder %s31, 1
      %p180 = por %p178, %p179
      %p182 = scmp.ne.s32.totalorder %s167, %s181
      %p183 = scmp.eq.s32.totalorder %s31, 0
      %p184 = por %p182, %p183
      %s186 = sadd.s32 %s185, 1
      %p189 = scmp.eq.s32.totalorder %s25, 1
      %p190 = scmp.ne.s32.totalorder %s185, %s187
      %p191 = scmp.eq.s32.totalorder %s25, 0
      %p192 = por %p190, %p191
      %p193 = scmp.ne.s32.totalorder %s185, %s187
      %p194 = scmp.eq.s32.totalorder %s30, 1
      %p195 = por %p193, %p194
      %p196 = scmp.ne.s32.totalorder %s187, %s188
      %p197 = scmp.eq.s32.totalorder %s30, 0
      %p198 = por %p196, %p197
      %p199 = scmp.ne.s32.totalorder %s187, %s188
      %p200 = scmp.eq.s32.totalorder %s31, 1
      %p201 = por %p199, %p200
      %p203 = scmp.ne.s32.totalorder %s188, %s202
      %p204 = scmp.eq.s32.totalorder %s31, 0
      %p205 = por %p203, %p204
      %s207 = sadd.s32 %s206, 1
      %p210 = scmp.eq.s32.totalorder %s25, 1
      %p211 = scmp.ne.s32.totalorder %s206, %s208
      %p212 = scmp.eq.s32.totalorder %s25, 0
      %p213 = por %p211, %p212
      %p214 = scmp.ne.s32.totalorder %s206, %s208
      %p215 = scmp.eq.s32.totalorder %s30, 1
      %p216 = por %p214, %p215
      %p217 = scmp.ne.s32.totalorder %s208, %s209
      %p218 = scmp.eq.s32.totalorder %s30, 0
      %p219 = por %p217, %p218
      %p220 = scmp.ne.s32.totalorder %s208, %s209
      %p221 = scmp.eq.s32.totalorder %s31, 1
      %p222 = por %p220, %p221
      %p224 = scmp.ne.s32.totalorder %s209, %s223
      %p225 = scmp.eq.s32.totalorder %s31, 0
      %p226 = por %p224, %p225
      %s227 = ssub.s32 %s32, %s44
      %s228 = ssub.s32 %s33, %s40
      %s229 = sor.u32 %s227, %s228
      %p230 = scmp.eq.s32.totalorder %s229, 0
      %s232 = sadd.s32 %s231, 1
      %s233 = scalar_select %p230, %s231, %s232
      %p236 = pneg %p230
      %p237 = scmp.eq.s32.totalorder %s25, 1
      %p238 = por %p236, %p237
      %p239 = scmp.ne.s32.totalorder %s231, %s234
      %p240 = scmp.eq.s32.totalorder %s25, 0
      %p241 = por %p239, %p240
      %p242 = scmp.ne.s32.totalorder %s231, %s234
      %p243 = scmp.eq.s32.totalorder %s30, 1
      %p244 = por %p242, %p243
      %p245 = scmp.ne.s32.totalorder %s234, %s235
      %p246 = scmp.eq.s32.totalorder %s30, 0
      %p247 = por %p245, %p246
      %p248 = scmp.ne.s32.totalorder %s234, %s235
      %p249 = scmp.eq.s32.totalorder %s31, 1
      %p250 = por %p248, %p249
      %p252 = scmp.ne.s32.totalorder %s235, %s251
      %p253 = scmp.eq.s32.totalorder %s31, 0
      %p254 = por %p252, %p253
      %s255 = ssub.s32 %s32, %s44
      %s256 = ssub.s32 %s33, %s40
      %s257 = sor.u32 %s255, %s256
      %p258 = scmp.eq.s32.totalorder %s257, 0
      %s260 = sadd.s32 %s259, 1
      %s261 = scalar_select %p258, %s259, %s260
      %p264 = pneg %p258
      %p265 = scmp.eq.s32.totalorder %s25, 1
      %p266 = por %p264, %p265
      %p267 = scmp.ne.s32.totalorder %s259, %s262
      %p268 = scmp.eq.s32.totalorder %s25, 0
      %p269 = por %p267, %p268
      %p270 = scmp.ne.s32.totalorder %s259, %s262
      %p271 = scmp.eq.s32.totalorder %s30, 1
      %p272 = por %p270, %p271
      %p273 = scmp.ne.s32.totalorder %s262, %s263
      %p274 = scmp.eq.s32.totalorder %s30, 0
      %p275 = por %p273, %p274
      %p276 = scmp.ne.s32.totalorder %s262, %s263
      %p277 = scmp.eq.s32.totalorder %s31, 1
      %p278 = por %p276, %p277
      %p280 = scmp.ne.s32.totalorder %s263, %s279
      %p281 = scmp.eq.s32.totalorder %s31, 0
      %p282 = por %p280, %p281
      %p283 = scmp.le.s32.totalorder 1, %s25
      %p284 = scmp.lt.s32.totalorder %s25, 3
      %p285 = pnand %p283, %p284
      %p286 = pneg %p285
      // Predicated region
      $region9: #{tpu_custom_call.1} parent=5 // pred_check
        _
      $region10: #{tpu_custom_call.1} parent=5 // pred_check_branch
        %288 = sbr.rel (%p285) target = $region12
      $region11: #{tpu_custom_call.1} parent=5 // pred_region
        %s289 = ssub.s32 %s25, 1
        // Predicated region
        $region13: #{tpu_custom_call.1} parent=11 // pred_check
          %p290 = pneg %p114
        $region14: #{tpu_custom_call.1} parent=11 // pred_check_branch
          %292 = sbr.rel (%p290) target = $region16
        $region15: #{tpu_custom_call.1} parent=11 // pred_region
          _
        $region16: #{tpu_custom_call.1} parent=11 // pred_fallthru
          _
        // Predicated region
        $region17: #{tpu_custom_call.1} parent=11 // pred_check
          %p293 = pneg %p135
        $region18: #{tpu_custom_call.1} parent=11 // pred_check_branch
          %295 = sbr.rel (%p293) target = $region20
        $region19: #{tpu_custom_call.1} parent=11 // pred_region
          _
        $region20: #{tpu_custom_call.1} parent=11 // pred_fallthru
          _
        // Predicated region
        $region21: #{tpu_custom_call.1} parent=11 // pred_check
          %p296 = pneg %p156
        $region22: #{tpu_custom_call.1} parent=11 // pred_check_branch
          %298 = sbr.rel (%p296) target = $region24
        $region23: #{tpu_custom_call.1} parent=11 // pred_region
          _
        $region24: #{tpu_custom_call.1} parent=11 // pred_fallthru
          _
        // Predicated region
        $region25: #{tpu_custom_call.1} parent=11 // pred_check
          %p299 = pneg %p177
        $region26: #{tpu_custom_call.1} parent=11 // pred_check_branch
          %301 = sbr.rel (%p299) target = $region28
        $region27: #{tpu_custom_call.1} parent=11 // pred_region
          _
        $region28: #{tpu_custom_call.1} parent=11 // pred_fallthru
          _
        // Predicated region
        $region29: #{tpu_custom_call.1} parent=11 // pred_check
          %p302 = pneg %p198
        $region30: #{tpu_custom_call.1} parent=11 // pred_check_branch
          %304 = sbr.rel (%p302) target = $region32
        $region31: #{tpu_custom_call.1} parent=11 // pred_region
          _
        $region32: #{tpu_custom_call.1} parent=11 // pred_fallthru
          _
        // Predicated region
        $region33: #{tpu_custom_call.1} parent=11 // pred_check
          %p305 = pneg %p219
        $region34: #{tpu_custom_call.1} parent=11 // pred_check_branch
          %307 = sbr.rel (%p305) target = $region36
        $region35: #{tpu_custom_call.1} parent=11 // pred_region
          _
        $region36: #{tpu_custom_call.1} parent=11 // pred_fallthru
          _
      $region12: #{tpu_custom_call.1} parent=5 // pred_fallthru
        _
      %p308 = scmp.lt.s32.totalorder %s25, 2
      // Predicated region
      $region37: #{tpu_custom_call.1} parent=5 // pred_check
        %p309 = pneg %p308
      $region38: #{tpu_custom_call.1} parent=5 // pred_check_branch
        %311 = sbr.rel (%p309) target = $region40
      $region39: #{tpu_custom_call.1} parent=5 // pred_region
        // Predicated region
        $region41: #{tpu_custom_call.1} parent=39 // pred_check
          %p312 = pneg %p59
        $region42: #{tpu_custom_call.1} parent=39 // pred_check_branch
          %314 = sbr.rel (%p312) target = $region44
        $region43: #{tpu_custom_call.1} parent=39 // pred_region
          %s315 = sand.u32 %s49, 1
          %s316 = scalar_lea.sflag [#allocation3], %s315
          %s317 = sand.u32 %s49, 1
          %s318 = smul.addr %s317, 8
          %s319 = scalar_lea.vmem [#allocation2], %s318
          %s320 = smul.u32 2, %s33
          %s322 = ssub.s32 128, 128
          %323 = vsyncadd %s316, %s322
          %s324 = smul.addr %s32, 2
          %s325 = sadd.s32 %s320, %s324
          %s326 = smul.addr %s325, 64
          %s327 = scalar_lea.hbm %s0, %s326
          %s329 = sshll.u32 %s319, 4
          %s330 = int_to_ptr.vmem [resolvable:$true] %s329
          %332 = dma.hbm_to_vmem [thread:$0]  %s327, 128, %s330, %s316
        $region44: #{tpu_custom_call.1} parent=39 // pred_fallthru
          _
        // Predicated region
        $region45: #{tpu_custom_call.1} parent=39 // pred_check
          %p333 = pneg %p87
        $region46: #{tpu_custom_call.1} parent=39 // pred_check_branch
          %335 = sbr.rel (%p333) target = $region48
        $region47: #{tpu_custom_call.1} parent=39 // pred_region
          %s336 = smul.u32 2, %s33
          %p337 = scmp.lt.s32.totalorder %s32, 1
          %s338 = scalar_select %p337, %s32, 1
          %p339 = scmp.lt.s32.totalorder %s336, 1
          %s340 = scalar_select %p339, %s336, 1
          %s341 = smul.addr %s338, 2
          %s342 = sadd.s32 %s340, %s341
          %s343 = smul.addr %s342, 8
          %s344 = scalar_lea.vmem %s1, %s343
          %s345 = smul.u32 2, %s33
        $region48: #{tpu_custom_call.1} parent=39 // pred_fallthru
          _
      $region40: #{tpu_custom_call.1} parent=5 // pred_fallthru
        _
      %p346 = scmp.le.s32.totalorder 1, %s25
      %p347 = scmp.lt.s32.totalorder %s25, 3
      %p348 = pnand %p346, %p347
      %p349 = pneg %p348
      // Predicated region
      $region49: #{tpu_custom_call.1} parent=5 // pred_check
        _
      $region50: #{tpu_custom_call.1} parent=5 // pred_check_branch
        %351 = sbr.rel (%p348) target = $region52
      $region51: #{tpu_custom_call.1} parent=5 // pred_region
        %s352 = ssub.s32 %s25, 1
        %s353 = sand.u32 %s52, 1
        %s354 = scalar_lea.sflag [#allocation3], %s353
        %s355 = sand.u32 %s52, 1
        %s356 = smul.addr %s355, 8
        %s357 = scalar_lea.vmem [#allocation2], %s356
        // Predicated region
        $region53: #{tpu_custom_call.1} parent=51 // pred_check
          %p358 = pneg %p65
        $region54: #{tpu_custom_call.1} parent=51 // pred_check_branch
          %360 = sbr.rel (%p358) target = $region56
        $region55: #{tpu_custom_call.1} parent=51 // pred_region
          %361 = dma.done %s354, 128
        $region56: #{tpu_custom_call.1} parent=51 // pred_fallthru
          _
        %s362 = sand.u32 %s52, 1
        %s363 = scalar_lea.sflag [#allocation3], %s362
        %s364 = sand.u32 %s52, 1
        %s365 = smul.addr %s364, 8
        %s366 = scalar_lea.vmem [#allocation2], %s365
        %p367 = pneg %p65
        %p368 = pneg %p62
        %s369 = smul.u32 2, %s35
        %p370 = scmp.lt.s32.totalorder %s34, 1
        %s371 = scalar_select %p370, %s34, 1
        %p372 = scmp.lt.s32.totalorder %s369, 1
        %s373 = scalar_select %p372, %s369, 1
        %s374 = smul.addr %s371, 2
        %s375 = sadd.s32 %s373, %s374
        %s376 = smul.addr %s375, 8
        %s377 = scalar_lea.vmem %s1, %s376
        %p378 = pneg %p93
        %p379 = pneg %p90
        %p380 = pneg %p114
        %p381 = pneg %p111
        %p382 = pneg %p135
        %p383 = pneg %p132
        %p384 = pneg %p156
        %p385 = pneg %p153
        %p386 = pneg %p177
        %p387 = pneg %p174
        %p388 = pneg %p198
        %p389 = pneg %p195
        %p390 = pneg %p219
        %p391 = pneg %p216
        %p392 = pneg %p247
        %p393 = pneg %p244
        %s394 = sand.u32 %s234, 1
        %s395 = scalar_lea.sflag [#allocation4], %s394
        %s396 = sand.u32 %s234, 1
        %s397 = smul.addr %s396, 8
        %s398 = scalar_lea.vmem [#allocation5], %s397
        %p399 = pneg %p275
        %p400 = pneg %p272
        %s401 = sand.u32 %s262, 1
        %s402 = scalar_lea.sflag [#allocation7], %s401
        %s403 = sand.u32 %s262, 1
        %s404 = smul.addr %s403, 4
        %s405 = scalar_lea.vmem [#allocation6], %s404
        %s406 = smul.u32 2, %s35
        %s407 = smul.u32 2, %s35
        %p408 = scmp.lt.s32.totalorder %s34, 1
        %s409 = scalar_select %p408, %s34, 1
        %p410 = scmp.lt.s32.totalorder %s407, 1
        %s411 = scalar_select %p410, %s407, 1
        %s412 = smul.addr %s409, 2
        %s413 = sadd.s32 %s411, %s412
        %s414 = smul.addr %s413, 8
        %s415 = scalar_lea.vmem %s1, %s414
        %s416 = smul.u32 2, %s35
        %s417 = smul.u32 2, %s35
        %s418 = smul.u32 2, %s35
        %v420 = vld [vmem:[%s357] sm:$0xff]
        %v422 = vcombine.high %v420, %v420
        %v424 = vpack.c.bf16 %v420, %v420
        %v425 = vpack.c.bf16 %v422, %v422
        %v426 = vld [vmem:[%s415] sm:$0xff]
        %v427 = vld [vmem:[%s415 + $0x8] sm:$0xff]
        %v428 = vpack.c.bf16 %v426, %v426
        %v429 = vpack.c.bf16 %v427, %v427
        %v430 = vld [vmem:[%s2] sm:$0xf]
        %v431 = vld [vmem:[%s2 + $0x4] sm:$0xf]
        %v432 = vld [vmem:[%s2 + $0x8] sm:$0xf]
        %v436 = vunpack.c.l.b16 %v430
        %v437 = vunpack.c.l.b16 %v431
        %v438 = vunpack.c.l.b16 %v432
        %v439 = vpack.c.b16 %v437, %v436
        %v440 = vpack.c.b16 %v438, %v438
        %vm441 = vcmask 31744
        %v443 = vsel %vm441, %v439, 0
        %v446 = vsel %vm441, %v440, 0
        %vm448 = vcmask 1041408
        %v450 = vsel %vm448, %v424, 0
        %v453 = vsel %vm448, %v425, 0
        %455 = vmatprep.subr.bf16.mxu0 0
        %456 = vmatpush1.bf16.msra.mxu0 0
        %457 = vmatprep.subr.bf16.mxu0 0
        %458 = vmatpush1.bf16.msra.mxu0 0
        %459 = vmatprep.subr.bf16.mxu0 0
        %460 = vmatpush1.bf16.msra.mxu0 0
        %461 = vmatprep.subr.bf16.mxu0 0
        %462 = vmatpush1.bf16.msra.mxu0 0
        %463 = vmatprep.subr.bf16.mxu0 0
        %464 = vmatpush1.bf16.msra.mxu0 0
        %465 = vmatprep.subr.bf16.mxu0 0
        %466 = vmatpush1.bf16.msra.mxu0 0
        %467 = vmatprep.subr.bf16.mxu0 0
        %468 = vmatpush1.bf16.msra.mxu0 0
        %469 = vmatprep.subr.bf16.mxu0 %v453
        %470 = vmatpush1.bf16.msra.mxu0 %v450
        %471 = vmatprep.subr.bf16.mxu0 0
        %472 = vmatpush2.bf16.msra.mxu0 0
        %473 = vmatprep.subr.bf16.mxu0 0
        %474 = vmatpush2.bf16.msra.mxu0 0
        %475 = vmatprep.subr.bf16.mxu0 0
        %476 = vmatpush2.bf16.msra.mxu0 0
        %477 = vmatprep.subr.bf16.mxu0 0
        %478 = vmatpush2.bf16.msra.mxu0 0
        %479 = vmatprep.subr.bf16.mxu0 0
        %480 = vmatpush2.bf16.msra.mxu0 0
        %481 = vmatprep.subr.bf16.mxu0 0
        %482 = vmatpush2.bf16.msra.mxu0 0
        %483 = vmatprep.subr.bf16.mxu0 0
        %484 = vmatpush2.bf16.msra.mxu0 0
        %485 = vmatprep.subr.bf16.mxu0 0
        %486 = vmatpush2.bf16.msra.mxu0 0
        %487 = vmatprep.mubr.bf16.mxu0 0
        %488 = vmatmul.mubr.bf16.gmra.mxu0 %v443
        %v489 = vpop.f32.mrf.mxu0
        %v490 = vadd.f32 0.0, %v489
        %v491 = vpop.f32.mrf.mxu0
        %v492 = vadd.f32 0.0, %v491
        %v493 = vpop.f32.mrf.mxu0
        %v494 = vadd.f32 0.0, %v493
        %v495 = vpop.f32.mrf.mxu0
        %v496 = vadd.f32 0.0, %v495
        %497 = vmatprep.mubr.bf16.mxu0 0
        %498 = vmatmul.mubr.bf16.gmra.mxu0 %v446
        %v499 = vpop.f32.mrf.mxu0
        %v500 = vadd.f32 0.0, %v499
        %v501 = vpop.f32.mrf.mxu0
        %v502 = vadd.f32 0.0, %v501
        %v503 = vpop.f32.mrf.mxu0
        %v504 = vpop.f32.mrf.mxu0
        %505 = vdwg.mxu0
        %v506 = vld [vmem:[%s3] sm:$0xf]
        %vm507 = vcmask 64512
        %v509 = vsel %vm507, %v506, 0
        %vm511 = vcmask 1043456
        %v513 = vsel %vm511, %v428, 0
        %v516 = vsel %vm511, %v429, 0
        %518 = vmatprep.subr.bf16.mxu0 0
        %519 = vmatpush1.bf16.msra.mxu0 0
        %520 = vmatprep.subr.bf16.mxu0 0
        %521 = vmatpush1.bf16.msra.mxu0 0
        %522 = vmatprep.subr.bf16.mxu0 0
        %523 = vmatpush1.bf16.msra.mxu0 0
        %524 = vmatprep.subr.bf16.mxu0 0
        %525 = vmatpush1.bf16.msra.mxu0 0
        %526 = vmatprep.subr.bf16.mxu0 0
        %527 = vmatpush1.bf16.msra.mxu0 0
        %528 = vmatprep.subr.bf16.mxu0 0
        %529 = vmatpush1.bf16.msra.mxu0 0
        %530 = vmatprep.subr.bf16.mxu0 0
        %531 = vmatpush1.bf16.msra.mxu0 0
        %532 = vmatprep.subr.bf16.mxu0 %v516
        %533 = vmatpush1.bf16.msra.mxu0 %v513
        %534 = vmatprep.subr.bf16.mxu0 0
        %535 = vmatpush2.bf16.msra.mxu0 0
        %536 = vmatprep.subr.bf16.mxu0 0
        %537 = vmatpush2.bf16.msra.mxu0 0
        %538 = vmatprep.subr.bf16.mxu0 0
        %539 = vmatpush2.bf16.msra.mxu0 0
        %540 = vmatprep.subr.bf16.mxu0 0
        %541 = vmatpush2.bf16.msra.mxu0 0
        %542 = vmatprep.subr.bf16.mxu0 0
        %543 = vmatpush2.bf16.msra.mxu0 0
        %544 = vmatprep.subr.bf16.mxu0 0
        %545 = vmatpush2.bf16.msra.mxu0 0
        %546 = vmatprep.subr.bf16.mxu0 0
        %547 = vmatpush2.bf16.msra.mxu0 0
        %548 = vmatprep.subr.bf16.mxu0 0
        %549 = vmatpush2.bf16.msra.mxu0 0
        %550 = vmatprep.mubr.bf16.mxu0 0
        %551 = vmatmul.mubr.bf16.gmra.mxu0 %v509
        %v552 = vpop.f32.mrf.mxu0
        %v553 = vadd.f32 0.0, %v552
        %v554 = vpop.f32.mrf.mxu0
        %v555 = vadd.f32 0.0, %v554
        %v556 = vpop.f32.mrf.mxu0
        %v557 = vpop.f32.mrf.mxu0
        %558 = vdwg.mxu0
        %v559 = vadd.f32 %v490, %v553
        %v560 = vadd.f32 %v492, %v555
        %v561 = vld [vmem:[%s4] sm:$0xff]
        %563 = vset.pattern.permute.xlu0 0
        %564 = vperm.xlu0 %563, %v561
        %v565 = vpop.permute.xlu0 %564
        %v567 = vadd.f32 %v559, %v565
        %v568 = vadd.f32 %v560, %v565
        %v569 = vmax.f32 %v567, 0.0
        %v570 = vmax.f32 %v568, 0.0
        %v571 = vld [vmem:[%s5] sm:$0x1]
        %v572 = vpack.c.bf16 %v569, %v569
        %v573 = vpack.c.bf16 %v570, %v570
        %v574 = vld [vmem:[%s6] sm:$0x3]
        %576 = vset.pattern.permute.xlu0 0
        %577 = vperm.xlu0 %576, %v574
        %v578 = vpop.permute.xlu0 %577
        %v581 = vsel %vm507, %v571, 0
        %v584 = vsel %vm511, %v572, 0
        %v587 = vsel %vm511, %v573, 0
        %589 = vmatprep.subr.bf16.mxu0 0
        %590 = vmatpush1.bf16.msra.mxu0 0
        %591 = vmatprep.subr.bf16.mxu0 0
        %592 = vmatpush1.bf16.msra.mxu0 0
        %593 = vmatprep.subr.bf16.mxu0 0
        %594 = vmatpush1.bf16.msra.mxu0 0
        %595 = vmatprep.subr.bf16.mxu0 0
        %596 = vmatpush1.bf16.msra.mxu0 0
        %597 = vmatprep.subr.bf16.mxu0 0
        %598 = vmatpush1.bf16.msra.mxu0 0
        %599 = vmatprep.subr.bf16.mxu0 0
        %600 = vmatpush1.bf16.msra.mxu0 0
        %601 = vmatprep.subr.bf16.mxu0 0
        %602 = vmatpush1.bf16.msra.mxu0 0
        %603 = vmatprep.subr.bf16.mxu0 %v587
        %604 = vmatpush1.bf16.msra.mxu0 %v584
        %605 = vmatprep.subr.bf16.mxu0 0
        %606 = vmatpush2.bf16.msra.mxu0 0
        %607 = vmatprep.subr.bf16.mxu0 0
        %608 = vmatpush2.bf16.msra.mxu0 0
        %609 = vmatprep.subr.bf16.mxu0 0
        %610 = vmatpush2.bf16.msra.mxu0 0
        %611 = vmatprep.subr.bf16.mxu0 0
        %612 = vmatpush2.bf16.msra.mxu0 0
        %613 = vmatprep.subr.bf16.mxu0 0
        %614 = vmatpush2.bf16.msra.mxu0 0
        %615 = vmatprep.subr.bf16.mxu0 0
        %616 = vmatpush2.bf16.msra.mxu0 0
        %617 = vmatprep.subr.bf16.mxu0 0
        %618 = vmatpush2.bf16.msra.mxu0 0
        %619 = vmatprep.subr.bf16.mxu0 0
        %620 = vmatpush2.bf16.msra.mxu0 0
        %621 = vmatprep.mubr.bf16.mxu0 0
        %622 = vmatmul.mubr.bf16.gmra.mxu0 %v581
        %v623 = vpop.f32.mrf.mxu0
        %v624 = vadd.f32 %v578, %v623
        %v625 = vpop.f32.mrf.mxu0
        %v626 = vadd.f32 %v578, %v625
        %v627 = vpop.f32.mrf.mxu0
        %v628 = vpop.f32.mrf.mxu0
        %629 = vdwg.mxu0
        %v630 = vxor.u32 %v624, 2147483648
        %v631 = vxor.u32 %v626, 2147483648
        %v632 = vmul.f32 %v630, 1.442695
        %v633 = vpow.pop %v632
        %v634 = vmul.f32 %v631, 1.442695
        %v635 = vpow.pop %v634
        %v636 = vadd.f32 %v633, 1.0
        %v637 = vadd.f32 %v635, 1.0
        %v638 = vrcp.pop %v636
        %v639 = vmul.f32 1.0, %v638
        %v640 = vrcp.pop %v637
        %v641 = vmul.f32 1.0, %v640
        %v644 = vcombine.low %v639, %v641
        %v646 = vunpack.c.l.s4 1983009808
        %v647 = vunpack.c.0.s8 %v646
        %v648 = vlaneseq
        %v649 = vshrl.u32 %v648, 7
        %v650 = vsub.s32 %v647, %v649
        %v651 = vrot.slane %v644, %v650
        %653 = vst [vmem:[%s405] sm:$0xf] %v651
        %v654 = vlaneseq
        %v655 = vshrl.u32 %v654, 7
        %v656 = vsub.s32 0, %v655
        %v657 = vrot.slane %v639, %v656
        %v658 = vlaneseq
        %v659 = vshrl.u32 %v658, 7
        %v660 = vsub.s32 0, %v659
        %v661 = vrot.slane %v641, %v660
        %v662 = vmul.f32 %v657, %v494
        %v663 = vmul.f32 %v661, %v496
        %v664 = vlaneseq
        %v665 = vshrl.u32 %v664, 7
        %v666 = vsub.s32 1, %v665
        %v667 = vrot.slane %v639, %v666
        %v668 = vlaneseq
        %v669 = vshrl.u32 %v668, 7
        %v670 = vsub.s32 1, %v669
        %v671 = vrot.slane %v641, %v670
        %v672 = vmul.f32 %v667, %v500
        %v673 = vmul.f32 %v671, %v502
        %v674 = vadd.f32 %v662, %v672
        %v675 = vadd.f32 %v663, %v673
        %v676 = vld [vmem:[%s7] sm:$0xff]
        %678 = vset.pattern.permute.xlu0 0
        %679 = vperm.xlu0 %678, %v676
        %v680 = vpop.permute.xlu0 %679
        %v682 = vadd.f32 %v674, %v680
        %v683 = vadd.f32 %v675, %v680
        %v684 = vmax.f32 %v682, 0.0
        %v685 = vmax.f32 %v683, 0.0
        %v688 = vcombine.low %v684, %v685
        %690 = vst [vmem:[%s398] sm:$0xff] %v688
        %s691 = sand.u32 %s234, 1
        %s692 = scalar_lea.sflag [#allocation4], %s691
        %s693 = sand.u32 %s234, 1
        %s694 = smul.addr %s693, 8
        %s695 = scalar_lea.vmem [#allocation5], %s694
        %s696 = sand.u32 %s262, 1
        %s697 = scalar_lea.sflag [#allocation7], %s696
        %s698 = sand.u32 %s262, 1
        %s699 = smul.addr %s698, 4
        %s700 = scalar_lea.vmem [#allocation6], %s699
        // Predicated region
        $region57: #{tpu_custom_call.1} parent=51 // pred_check
          %p701 = pneg %p244
        $region58: #{tpu_custom_call.1} parent=51 // pred_check_branch
          %703 = sbr.rel (%p701) target = $region60
        $region59: #{tpu_custom_call.1} parent=51 // pred_region
          %s704 = smul.u32 2, %s35
          %s706 = ssub.s32 128, 128
          %707 = vsyncadd %s692, %s706
          %s708 = smul.addr %s34, 2
          %s709 = sadd.s32 %s704, %s708
          %s710 = smul.addr %s709, 64
          %s711 = scalar_lea.hbm %s8, %s710
          %s713 = sshll.u32 %s695, 4
          %s714 = int_to_ptr.vmem [resolvable:$true] %s713
          %716 = dma.vmem_to_hbm [thread:$0]  %s714, 128, %s711, %s692
        $region60: #{tpu_custom_call.1} parent=51 // pred_fallthru
          _
        // Predicated region
        $region61: #{tpu_custom_call.1} parent=51 // pred_check
          %p717 = pneg %p272
        $region62: #{tpu_custom_call.1} parent=51 // pred_check_branch
          %719 = sbr.rel (%p717) target = $region64
        $region63: #{tpu_custom_call.1} parent=51 // pred_region
          %s720 = smul.u32 2, %s35
          %s722 = ssub.s32 64, 64
          %723 = vsyncadd %s697, %s722
          %s724 = smul.addr %s34, 2
          %s725 = sadd.s32 %s720, %s724
          %s726 = smul.addr %s725, 32
          %s727 = scalar_lea.hbm %s9, %s726
          %s729 = sshll.u32 %s700, 4
          %s730 = int_to_ptr.vmem [resolvable:$true] %s729
          %732 = dma.vmem_to_hbm [thread:$0]  %s730, 64, %s727, %s697
        $region64: #{tpu_custom_call.1} parent=51 // pred_fallthru
          _
      $region52: #{tpu_custom_call.1} parent=5 // pred_fallthru
        _
      %p733 = scmp.le.s32.totalorder 2, %s25
      // Predicated region
      $region65: #{tpu_custom_call.1} parent=5 // pred_check
        %p734 = pneg %p733
      $region66: #{tpu_custom_call.1} parent=5 // pred_check_branch
        %736 = sbr.rel (%p734) target = $region68
      $region67: #{tpu_custom_call.1} parent=5 // pred_region
        %s737 = ssub.s32 %s25, 2
        // Predicated region
        $region69: #{tpu_custom_call.1} parent=67 // pred_check
          %p738 = pneg %p250
        $region70: #{tpu_custom_call.1} parent=67 // pred_check_branch
          %740 = sbr.rel (%p738) target = $region72
        $region71: #{tpu_custom_call.1} parent=67 // pred_region
          %s741 = sand.u32 %s235, 1
          %s742 = scalar_lea.sflag [#allocation4], %s741
          %s743 = sand.u32 %s235, 1
          %s744 = smul.addr %s743, 8
          %s745 = scalar_lea.vmem [#allocation5], %s744
          %746 = dma.done %s742, 128
        $region72: #{tpu_custom_call.1} parent=67 // pred_fallthru
          _
        // Predicated region
        $region73: #{tpu_custom_call.1} parent=67 // pred_check
          %p747 = pneg %p278
        $region74: #{tpu_custom_call.1} parent=67 // pred_check_branch
          %749 = sbr.rel (%p747) target = $region76
        $region75: #{tpu_custom_call.1} parent=67 // pred_region
          %s750 = sand.u32 %s263, 1
          %s751 = scalar_lea.sflag [#allocation7], %s750
          %s752 = sand.u32 %s263, 1
          %s753 = smul.addr %s752, 4
          %s754 = scalar_lea.vmem [#allocation6], %s753
          %755 = dma.done %s751, 64
        $region76: #{tpu_custom_call.1} parent=67 // pred_fallthru
          _
      $region68: #{tpu_custom_call.1} parent=5 // pred_fallthru
        _
    $region6: #{tpu_custom_call.1} parent=1 // loop_footer
      %s29 = sadd.s32 1, %s25
    $region7: #{tpu_custom_call.1} parent=1 // loop_footer_branch
      %24 = sbr.rel target = $region3
    $region8: #{tpu_custom_call.1} parent=1 // loop_exit
      _
    %756 = vsyncpa [#allocation3], 1
    %s757 = scalar_lea.sflag [#allocation3], 1
    %758 = vsyncpa %s757, 1
    %759 = vsyncpa [#allocation4], 1
    %s760 = scalar_lea.sflag [#allocation4], 1
    %761 = vsyncpa %s760, 1
    %762 = vsyncpa [#allocation7], 1
    %s763 = scalar_lea.sflag [#allocation7], 1
    %764 = vsyncpa %s763, 1

</llo_original>
